<compile_context>
chip_gen: v5e
topology: v5e:2x2
jax: 0.10.0
libtpu: 0.0.40
codegen_flags: <defaults>
</compile_context>

<pallas_src>
import jax
import jax.numpy as jnp
from jax.experimental import pallas as pl
from jax.experimental.pallas import tpu as pltpu

EPS = 1e-5
LANE = 128


def _round_up(n, m):
    return ((n + m - 1) // m) * m


def _num_tensorcores():
    """Best-effort count of TensorCores behind the first device (1 or 2)."""
    try:
        nc = getattr(jax.devices()[0], "num_cores", None)
        if not nc:
            return 1
        return max(1, min(2, int(nc)))
    except Exception:
        return 1


# ----------------------------------------------------------------------------
# Kernel: fused (BN-folded) MLP  ->  relu(x@W1+c1) -> relu(.@W2+c2) -> .@W3+c3
# ----------------------------------------------------------------------------
def simple_nn_kernel(x_ref, w1_ref, c1_ref, w2_ref, c2_ref, w3_ref, c3_ref, out_ref):
    # BatchNorms are folded into (w, c) on the host; dropout is identity (eval).
    x = x_ref[...].astype(jnp.bfloat16)
    h = jnp.dot(x, w1_ref[...], preferred_element_type=jnp.float32) + c1_ref[...]
    h = jnp.maximum(h, 0.0).astype(jnp.bfloat16)
    h = jnp.dot(h, w2_ref[...], preferred_element_type=jnp.float32) + c2_ref[...]
    h = jnp.maximum(h, 0.0).astype(jnp.bfloat16)
    out = jnp.dot(h, w3_ref[...], preferred_element_type=jnp.float32) + c3_ref[...]
    out_ref[...] = out.astype(out_ref.dtype)          # bf16 store -> half the writeback


# ----------------------------------------------------------------------------
# Host-side parameter preparation (done once, not per call)
# ----------------------------------------------------------------------------
def prepare_params(params):
    """Fold eval-mode BatchNorms into the Linears, pad classes to 128 lanes,
    cast weights to bf16 (biases stay f32; they are added post-accumulation)."""
    p = params

    def bn_affine(g, b, m, v):
        s = g * jax.lax.rsqrt(v + EPS)          # scale
        return s, b - m * s                      # scale, shift

    s0, t0 = bn_affine(p["g0"], p["b0"], p["m0"], p["v0"])
    s1, t1 = bn_affine(p["g1"], p["b1"], p["m1"], p["v1"])
    s2, t2 = bn_affine(p["g2"], p["b2"], p["m2"], p["v2"])

    # bn0 folds into fc1's input side, bn1 into fc1's output side.
    w1 = (s0.reshape(-1, 1) * p["w1"]) * s1                  # [in, h0]
    c1 = (t0 @ p["w1"] + p["c1"]) * s1 + t1                  # [1, h0]
    # bn2 folds into fc2's output side.
    w2 = p["w2"] * s2                                        # [h0, h1]
    c2 = p["c2"] * s2 + t2                                   # [1, h1]
    w3, c3 = p["w3"], p["c3"]                                # [h1, nc], [1, nc]

    # Lane-dense output: pad class dim up to a multiple of 128.
    nc = w3.shape[1]
    ncp = _round_up(nc, LANE)
    if ncp != nc:
        w3 = jnp.pad(w3, ((0, 0), (0, ncp - nc)))
        c3 = jnp.pad(c3, ((0, 0), (0, ncp - nc)))

    return {
        "w1": w1.astype(jnp.bfloat16), "c1": c1.astype(jnp.float32),
        "w2": w2.astype(jnp.bfloat16), "c2": c2.astype(jnp.float32),
        "w3": w3.astype(jnp.bfloat16), "c3": c3.astype(jnp.float32),
    }


# ----------------------------------------------------------------------------
# Wrapper: batch-gridded pallas_call with VMEM-resident weights
# ----------------------------------------------------------------------------
def simple_nn_forward(x, kparams, num_classes, *, tile_b=1024,
                      out_dtype=jnp.bfloat16, num_cores=None):
    """x: [B, input_size] (float32 or bfloat16). kparams: prepare_params output."""
    B, f_in = x.shape
    h0 = kparams["w1"].shape[1]
    h1 = kparams["w2"].shape[1]
    ncp = kparams["w3"].shape[1]

    if num_cores is None:
        num_cores = _num_tensorcores()

    # Tile selection: no host-side padding of x, no row slice of the output.
    #  - single-TC + small batch: one fat step (block dim == full dim is legal
    #    even if B is not a multiple of 8).
    #  - otherwise: tb is a multiple of 8, capped at tile_b, chosen so the grid
    #    has at least `num_cores` steps; the trailing partial block is masked
    #    by Pallas.
    if num_cores <= 1 and B <= tile_b:
        tb = B
    else:
        tb = min(tile_b, _round_up(pl.cdiv(B, num_cores), 8))
        tb = max(8, (tb // 8) * 8)
    grid = (pl.cdiv(B, tb),)

    flops = 2 * B * (f_in * h0 + h0 * h1 + h1 * ncp)
    bytes_accessed = (
        B * f_in * x.dtype.itemsize                     # x in
        + B * ncp * jnp.dtype(out_dtype).itemsize       # out (bf16)
        + 2 * (f_in * h0 + h0 * h1 + h1 * ncp)          # bf16 weights
        + 4 * (h0 + h1 + ncp)                           # f32 biases
    )

    out_p = pl.pallas_call(
        simple_nn_kernel,
        out_shape=jax.ShapeDtypeStruct((B, ncp), out_dtype),
        grid=grid,
        in_specs=[
            pl.BlockSpec((tb, f_in), lambda i: (i, 0)),    # x tile (pipelined)
            pl.BlockSpec((f_in, h0), lambda i: (0, 0)),    # W1 (VMEM-resident)
            pl.BlockSpec((1, h0),    lambda i: (0, 0)),    # c1
            pl.BlockSpec((h0, h1),   lambda i: (0, 0)),    # W2
            pl.BlockSpec((1, h1),    lambda i: (0, 0)),    # c2
            pl.BlockSpec((h1, ncp),  lambda i: (0, 0)),    # W3 (lane-padded)
            pl.BlockSpec((1, ncp),   lambda i: (0, 0)),    # c3 (lane-padded)
        ],
        out_specs=pl.BlockSpec((tb, ncp), lambda i: (i, 0)),
        compiler_params=pltpu.CompilerParams(
            dimension_semantics=("parallel",),             # megacore-shardable
        ),
        cost_estimate=pl.CostEstimate(
            flops=flops, transcendentals=0, bytes_accessed=bytes_accessed),
    )(x, kparams["w1"], kparams["c1"], kparams["w2"], kparams["c2"],
      kparams["w3"], kparams["c3"])

    return out_p[:, :num_classes]


# ----------------------------------------------------------------------------
# Parameter init (PyTorch-consistent shapes; Linear weights stored as [in, out])
# ----------------------------------------------------------------------------
def init_params(key, input_size, hidden_size, num_classes):
    ks = jax.random.split(key, 12)
    h0, h1 = hidden_size

    def lin(kw, kb, fan_in, fan_out):
        bound = 1.0 / jnp.sqrt(fan_in)
        w = jax.random.uniform(kw, (fan_in, fan_out), jnp.float32, -bound, bound)
        b = jax.random.uniform(kb, (1, fan_out), jnp.float32, -bound, bound)
        return w, b

    def bn(kg, kb, n):
        gamma = 1.0 + 0.1 * jax.random.normal(kg, (1, n), jnp.float32)
        beta = 0.1 * jax.random.normal(kb, (1, n), jnp.float32)
        mean = 0.05 * jax.random.normal(jax.random.fold_in(kg, 1), (1, n), jnp.float32)
        var = jnp.abs(1.0 + 0.1 * jax.random.normal(jax.random.fold_in(kb, 1), (1, n), jnp.float32))
        return gamma, beta, mean, var

    p = {}
    p["w1"], p["c1"] = lin(ks[0], ks[1], input_size, h0)
    p["w2"], p["c2"] = lin(ks[2], ks[3], h0, h1)
    p["w3"], p["c3"] = lin(ks[4], ks[5], h1, num_classes)
    p["g0"], p["b0"], p["m0"], p["v0"] = bn(ks[6], ks[7], input_size)
    p["g1"], p["b1"], p["m1"], p["v1"] = bn(ks[8], ks[9], h0)
    p["g2"], p["b2"], p["m2"], p["v2"] = bn(ks[10], ks[11], h1)
    return p


# ----------------------------------------------------------------------------
# References for validation
# ----------------------------------------------------------------------------
def reference_forward(x, p):
    """Pure-JAX f32 reference of the original module (eval-mode) semantics."""
    def bn(h, g, b, m, v):
        return (h - m) * jax.lax.rsqrt(v + EPS) * g + b

    h = bn(x, p["g0"], p["b0"], p["m0"], p["v0"])
    h = h @ p["w1"] + p["c1"]
    h = bn(h, p["g1"], p["b1"], p["m1"], p["v1"])
    h = jnp.maximum(h, 0.0)
    h = h @ p["w2"] + p["c2"]
    h = bn(h, p["g2"], p["b2"], p["m2"], p["v2"])
    h = jnp.maximum(h, 0.0)
    return h @ p["w3"] + p["c3"]


def reference_forward_folded(x, kp, num_classes):
    """Pure-JAX mirror of the kernel's math (folded BN, bf16 operands, f32 acc)."""
    h = jnp.dot(x.astype(jnp.bfloat16), kp["w1"], preferred_element_type=jnp.float32) + kp["c1"]
    h = jnp.maximum(h, 0.0).astype(jnp.bfloat16)
    h = jnp.dot(h, kp["w2"], preferred_element_type=jnp.float32) + kp["c2"]
    h = jnp.maximum(h, 0.0).astype(jnp.bfloat16)
    out = jnp.dot(h, kp["w3"], preferred_element_type=jnp.float32) + kp["c3"]
    return out[:, :num_classes]


if __name__ == "__main__":
    # Small, module-consistent shapes: x is [batch, input_size]
    B, INPUT_SIZE, HIDDEN, NUM_CLASSES = 64, 32, [128, 64], 16

    key = jax.random.PRNGKey(0)
    kx, kp = jax.random.split(key)
    x = jax.random.normal(kx, (B, INPUT_SIZE), jnp.float32)
    params = init_params(kp, INPUT_SIZE, HIDDEN, NUM_CLASSES)

    kparams = prepare_params(params)

    # Default tile_b (1024) -> one fat step on single-TC chips, two steps on
    # chips that expose 2 TensorCores; no host-side padding either way.
    out = simple_nn_forward(x, kparams, NUM_CLASSES)
    out = jax.block_until_ready(out)
    assert out.shape == (B, NUM_CLASSES)

    out_f32 = out.astype(jnp.float32)

    # Tight check: kernel vs a JAX mirror of the identical folded/bf16 math
    # (remaining delta is the final bf16 output rounding only).
    ref_mirror = reference_forward_folded(x, kparams, NUM_CLASSES)
    assert jnp.allclose(out_f32, ref_mirror, atol=2e-2, rtol=2e-2), \
        "mismatch vs folded-bf16 mirror"

    # Sanity check: kernel vs original module semantics in f32 (fold is exact;
    # remaining delta is bf16 weight/activation/output rounding only).
    ref_f32 = reference_forward(x, params)
    assert jnp.allclose(out_f32, ref_f32, atol=1e-1, rtol=1e-1), \
        "mismatch vs f32 module reference"

    print("KERNEL_OK")
</pallas_src>

<mosaic_0001>
module attributes {stable_mosaic.version = 11 : i64} {
  func.func @simple_nn_kernel(%arg0: i32, %arg1: memref<64x32xf32, #tpu.memory_space<vmem>>, %arg2: memref<32x128xbf16, #tpu.memory_space<vmem>>, %arg3: memref<1x128xf32, #tpu.memory_space<vmem>>, %arg4: memref<128x64xbf16, #tpu.memory_space<vmem>>, %arg5: memref<1x64xf32, #tpu.memory_space<vmem>>, %arg6: memref<64x128xbf16, #tpu.memory_space<vmem>>, %arg7: memref<1x128xf32, #tpu.memory_space<vmem>>, %arg8: memref<64x128xbf16, #tpu.memory_space<vmem>>) attributes {dimension_semantics = [#tpu.dimension_semantics<parallel>], iteration_bounds = array<i64: 1>, scalar_prefetch = 0 : i64, scratch_operands = 0 : i64, tpu.core_type = #tpu.core_type<tc>, window_params = [{transform_indices = @transform_0, window_bounds = array<i64: 64, 32>}, {pipeline_mode = #tpu.pipeline_mode<synchronous>, transform_indices = @transform_1, window_bounds = array<i64: 32, 128>}, {pipeline_mode = #tpu.pipeline_mode<synchronous>, transform_indices = @transform_2, window_bounds = array<i64: 1, 128>}, {pipeline_mode = #tpu.pipeline_mode<synchronous>, transform_indices = @transform_3, window_bounds = array<i64: 128, 64>}, {pipeline_mode = #tpu.pipeline_mode<synchronous>, transform_indices = @transform_4, window_bounds = array<i64: 1, 64>}, {pipeline_mode = #tpu.pipeline_mode<synchronous>, transform_indices = @transform_5, window_bounds = array<i64: 64, 128>}, {pipeline_mode = #tpu.pipeline_mode<synchronous>, transform_indices = @transform_6, window_bounds = array<i64: 1, 128>}, {transform_indices = @transform_7, window_bounds = array<i64: 64, 128>}]} {
    %c0 = arith.constant 0 : index
    %c0_0 = arith.constant 0 : index
    %0 = vector.load %arg1[%c0, %c0_0] : memref<64x32xf32, #tpu.memory_space<vmem>>, vector<64x32xf32>
    %1 = arith.truncf %0 : vector<64x32xf32> to vector<64x32xbf16>
    %c0_1 = arith.constant 0 : index
    %c0_2 = arith.constant 0 : index
    %2 = vector.load %arg2[%c0_1, %c0_2] : memref<32x128xbf16, #tpu.memory_space<vmem>>, vector<32x128xbf16>
    %cst = arith.constant dense<0.000000e+00> : vector<64x128xf32>
    %3 = tpu.matmul %1, %2, %cst {dimension_numbers = #tpu.dot_dimension_numbers<[1], [0], [0], [1], [0, 0, 1, 1], [], []>} : vector<64x32xbf16>, vector<32x128xbf16>, vector<64x128xf32> -> vector<64x128xf32>
    %c0_3 = arith.constant 0 : index
    %c0_4 = arith.constant 0 : index
    %4 = vector.load %arg3[%c0_3, %c0_4] : memref<1x128xf32, #tpu.memory_space<vmem>>, vector<1x128xf32>
    %5 = vector.broadcast %4 : vector<1x128xf32> to vector<64x128xf32>
    %6 = arith.addf %3, %5 : vector<64x128xf32>
    %cst_5 = arith.constant 0.000000e+00 : f32
    %7 = vector.broadcast %cst_5 : f32 to vector<64x128xf32>
    %8 = arith.maximumf %6, %7 : vector<64x128xf32>
    %9 = arith.truncf %8 : vector<64x128xf32> to vector<64x128xbf16>
    %c0_6 = arith.constant 0 : index
    %c0_7 = arith.constant 0 : index
    %10 = vector.load %arg4[%c0_6, %c0_7] : memref<128x64xbf16, #tpu.memory_space<vmem>>, vector<128x64xbf16>
    %cst_8 = arith.constant dense<0.000000e+00> : vector<64x64xf32>
    %11 = tpu.matmul %9, %10, %cst_8 {dimension_numbers = #tpu.dot_dimension_numbers<[1], [0], [0], [1], [0, 0, 1, 1], [], []>} : vector<64x128xbf16>, vector<128x64xbf16>, vector<64x64xf32> -> vector<64x64xf32>
    %c0_9 = arith.constant 0 : index
    %c0_10 = arith.constant 0 : index
    %12 = vector.load %arg5[%c0_9, %c0_10] : memref<1x64xf32, #tpu.memory_space<vmem>>, vector<1x64xf32>
    %13 = vector.broadcast %12 : vector<1x64xf32> to vector<64x64xf32>
    %14 = arith.addf %11, %13 : vector<64x64xf32>
    %cst_11 = arith.constant 0.000000e+00 : f32
    %15 = vector.broadcast %cst_11 : f32 to vector<64x64xf32>
    %16 = arith.maximumf %14, %15 : vector<64x64xf32>
    %17 = arith.truncf %16 : vector<64x64xf32> to vector<64x64xbf16>
    %c0_12 = arith.constant 0 : index
    %c0_13 = arith.constant 0 : index
    %18 = vector.load %arg6[%c0_12, %c0_13] : memref<64x128xbf16, #tpu.memory_space<vmem>>, vector<64x128xbf16>
    %cst_14 = arith.constant dense<0.000000e+00> : vector<64x128xf32>
    %19 = tpu.matmul %17, %18, %cst_14 {dimension_numbers = #tpu.dot_dimension_numbers<[1], [0], [0], [1], [0, 0, 1, 1], [], []>} : vector<64x64xbf16>, vector<64x128xbf16>, vector<64x128xf32> -> vector<64x128xf32>
    %c0_15 = arith.constant 0 : index
    %c0_16 = arith.constant 0 : index
    %20 = vector.load %arg7[%c0_15, %c0_16] : memref<1x128xf32, #tpu.memory_space<vmem>>, vector<1x128xf32>
    %21 = vector.broadcast %20 : vector<1x128xf32> to vector<64x128xf32>
    %22 = arith.addf %19, %21 : vector<64x128xf32>
    %23 = arith.truncf %22 : vector<64x128xf32> to vector<64x128xbf16>
    %c0_17 = arith.constant 0 : index
    %c0_18 = arith.constant 0 : index
    %24 = vector.load %arg8[%c0_17, %c0_18] : memref<64x128xbf16, #tpu.memory_space<vmem>>, vector<64x128xbf16>
    tpu.vector_store %arg8[%c0_17, %c0_18], %23 {strides = array<i32>} : memref<64x128xbf16, #tpu.memory_space<vmem>>, vector<64x128xbf16>,
    return
  }
  func.func @transform_0(%arg0: i32) -> (i32, i32) {
    %c0_i32 = arith.constant 0 : i32
    %c0_i32_0 = arith.constant 0 : i32
    return %arg0, %c0_i32 : i32, i32
  }
  func.func @transform_1(%arg0: i32) -> (i32, i32) {
    %c0_i32 = arith.constant 0 : i32
    %c0_i32_0 = arith.constant 0 : i32
    %c0_i32_1 = arith.constant 0 : i32
    return %c0_i32, %c0_i32_0 : i32, i32
  }
  func.func @transform_2(%arg0: i32) -> (i32, i32) {
    %c0_i32 = arith.constant 0 : i32
    %c0_i32_0 = arith.constant 0 : i32
    %c0_i32_1 = arith.constant 0 : i32
    return %c0_i32, %c0_i32_0 : i32, i32
  }
  func.func @transform_3(%arg0: i32) -> (i32, i32) {
    %c0_i32 = arith.constant 0 : i32
    %c0_i32_0 = arith.constant 0 : i32
    %c0_i32_1 = arith.constant 0 : i32
    return %c0_i32, %c0_i32_0 : i32, i32
  }
  func.func @transform_4(%arg0: i32) -> (i32, i32) {
    %c0_i32 = arith.constant 0 : i32
    %c0_i32_0 = arith.constant 0 : i32
    %c0_i32_1 = arith.constant 0 : i32
    return %c0_i32, %c0_i32_0 : i32, i32
  }
  func.func @transform_5(%arg0: i32) -> (i32, i32) {
    %c0_i32 = arith.constant 0 : i32
    %c0_i32_0 = arith.constant 0 : i32
    %c0_i32_1 = arith.constant 0 : i32
    return %c0_i32, %c0_i32_0 : i32, i32
  }
  func.func @transform_6(%arg0: i32) -> (i32, i32) {
    %c0_i32 = arith.constant 0 : i32
    %c0_i32_0 = arith.constant 0 : i32
    %c0_i32_1 = arith.constant 0 : i32
    return %c0_i32, %c0_i32_0 : i32, i32
  }
  func.func @transform_7(%arg0: i32) -> (i32, i32) {
    %c0_i32 = arith.constant 0 : i32
    %c0_i32_0 = arith.constant 0 : i32
    return %arg0, %c0_i32 : i32, i32
  }
}

</mosaic_0001>

<llo_original>
// kernel: tpu_custom_call.1
$region0: #{tpu_custom_call.1}
  #allocation0 [shape = 'u32[]', space=smem, size = 0x4, offset = 0x4, fixed_abs, tag = 'smem constant byte address 0x4 - core index']
  #allocation1 [shape = 'u32[72,128]{1,0:T(1,128)}', space=vmem, size = 0x9000, scoped, tag = 'internal scratch']
  %s0 = inlined_call_operand.vmem [shape: f32[64,32], index: 0, kind: input, shape index: {}]
  %s1 = inlined_call_operand.vmem [shape: bf16[32,128], index: 1, kind: input, shape index: {}]
  %s2 = inlined_call_operand.vmem [shape: f32[1,128], index: 2, kind: input, shape index: {}]
  %s3 = inlined_call_operand.vmem [shape: bf16[128,64], index: 3, kind: input, shape index: {}]
  %s4 = inlined_call_operand.vmem [shape: f32[1,64], index: 4, kind: input, shape index: {}]
  %s5 = inlined_call_operand.vmem [shape: bf16[64,128], index: 5, kind: input, shape index: {}]
  %s6 = inlined_call_operand.vmem [shape: f32[1,128], index: 6, kind: input, shape index: {}]
  %s7 = inlined_call_operand.hbm [shape: bf16[64,128], index: 7, kind: output, shape index: {}]
  %s8 = sld [smem:[#allocation0]]
  $region38: #{tpu_custom_call.1} parent=0
    _
  %s10 = ssub.s32 1, %s8
  %s11 = scalar_select 0, %s10, %s8
  $region1: #{tpu_custom_call.1} parent=0
    #allocation2 [shape = 'u8[16384]{0}', space=vmem, size = 0x4000, scoped, tag = 'output window, operand 0, single buffered']
    #allocation3 [shape = 's32[1]{0}', space=sflag, size = 0x4, scoped, tag = 'scoped memory for tpu_custom_call.1']
    %12 = vsyncpa [#allocation3], 0
    // Predicated region
    $region2: #{tpu_custom_call.1} parent=1 // pred_check
      _
    $region3: #{tpu_custom_call.1} parent=1 // pred_check_branch
      %14 = sbr.rel (0) target = $region5
    $region4: #{tpu_custom_call.1} parent=1 // pred_region
      _
    $region5: #{tpu_custom_call.1} parent=1 // pred_fallthru
      _
    // Predicated region
    $region6: #{tpu_custom_call.1} parent=1 // pred_check
      _
    $region7: #{tpu_custom_call.1} parent=1 // pred_check_branch
      %16 = sbr.rel (0) target = $region9
    $region8: #{tpu_custom_call.1} parent=1 // pred_region
      _
    $region9: #{tpu_custom_call.1} parent=1 // pred_fallthru
      _
    // Predicated region
    $region10: #{tpu_custom_call.1} parent=1 // pred_check
      _
    $region11: #{tpu_custom_call.1} parent=1 // pred_check_branch
      %18 = sbr.rel (0) target = $region13
    $region12: #{tpu_custom_call.1} parent=1 // pred_region
      _
    $region13: #{tpu_custom_call.1} parent=1 // pred_fallthru
      _
    // Predicated region
    $region14: #{tpu_custom_call.1} parent=1 // pred_check
      _
    $region15: #{tpu_custom_call.1} parent=1 // pred_check_branch
      %20 = sbr.rel (0) target = $region17
    $region16: #{tpu_custom_call.1} parent=1 // pred_region
      _
    $region17: #{tpu_custom_call.1} parent=1 // pred_fallthru
      _
    // Predicated region
    $region18: #{tpu_custom_call.1} parent=1 // pred_check
      _
    $region19: #{tpu_custom_call.1} parent=1 // pred_check_branch
      %22 = sbr.rel (0) target = $region21
    $region20: #{tpu_custom_call.1} parent=1 // pred_region
      _
    $region21: #{tpu_custom_call.1} parent=1 // pred_fallthru
      _
    // Predicated region
    $region22: #{tpu_custom_call.1} parent=1 // pred_check
      _
    $region23: #{tpu_custom_call.1} parent=1 // pred_check_branch
      %24 = sbr.rel (0) target = $region25
    $region24: #{tpu_custom_call.1} parent=1 // pred_region
      _
    $region25: #{tpu_custom_call.1} parent=1 // pred_fallthru
      _
    // Predicated region
    $region26: #{tpu_custom_call.1} parent=1 // pred_check
      _
    $region27: #{tpu_custom_call.1} parent=1 // pred_check_branch
      %26 = sbr.rel (0) target = $region29
    $region28: #{tpu_custom_call.1} parent=1 // pred_region
      _
    $region29: #{tpu_custom_call.1} parent=1 // pred_fallthru
      _
    %v28 = vld [vmem:[%s0] sm:$0xff]
    %v29 = vld [vmem:[%s0 + $0x8] sm:$0xff]
    %v30 = vld [vmem:[%s0 + $0x10] sm:$0xff]
    %v31 = vld [vmem:[%s0 + $0x18] sm:$0xff]
    %v32 = vld [vmem:[%s0 + $0x20] sm:$0xff]
    %v33 = vld [vmem:[%s0 + $0x28] sm:$0xff]
    %v34 = vld [vmem:[%s0 + $0x30] sm:$0xff]
    %v35 = vld [vmem:[%s0 + $0x38] sm:$0xff]
    %v36 = vpack.c.bf16 %v29, %v28
    %v37 = vpack.c.bf16 %v31, %v30
    %v38 = vpack.c.bf16 %v33, %v32
    %v39 = vpack.c.bf16 %v35, %v34
    %v40 = vld [vmem:[%s1] sm:$0xf]
    %v41 = vld [vmem:[%s1 + $0x4] sm:$0xf]
    %v42 = vld [vmem:[%s1 + $0x8] sm:$0xf]
    %v43 = vld [vmem:[%s1 + $0xc] sm:$0xf]
    %v44 = vld [vmem:[%s2] sm:$0x1]
    %v46 = vperm.slane %v44, 0
    %v52 = vunpack.c.l.b16 %v40
    %v53 = vunpack.c.l.b16 %v41
    %v54 = vunpack.c.l.b16 %v42
    %v55 = vunpack.c.l.b16 %v43
    %v56 = vpack.c.b16 %v53, %v52
    %v57 = vpack.c.b16 %v55, %v54
    %vm60 = vcmask 261120
    %v62 = vsel %vm60, %v36, 0
    %v65 = vsel %vm60, %v37, 0
    %v68 = vsel %vm60, %v38, 0
    %v71 = vsel %vm60, %v39, 0
    %73 = vmatpush.bf16.msra.mxu0 0
    %74 = vmatpush.bf16.msra.mxu0 0
    %75 = vmatpush.bf16.msra.mxu0 0
    %76 = vmatpush.bf16.msra.mxu0 0
    %77 = vmatpush.bf16.msra.mxu0 0
    %78 = vmatpush.bf16.msra.mxu0 0
    %79 = vmatpush.bf16.msra.mxu0 %v57
    %80 = vmatpush.bf16.msra.mxu0 %v56
    %81 = vmatmul.bf16.gmra.mxu0 %v62
    %v82 = vpop.f32.mrf.mxu0
    %v83 = vadd.f32 %v46, %v82
    %v84 = vpop.f32.mrf.mxu0
    %v85 = vadd.f32 %v46, %v84
    %86 = vmatmul.bf16.gmra.mxu0 %v65
    %v87 = vpop.f32.mrf.mxu0
    %v88 = vadd.f32 %v46, %v87
    %v89 = vpop.f32.mrf.mxu0
    %v90 = vadd.f32 %v46, %v89
    %91 = vmatmul.bf16.gmra.mxu0 %v68
    %v92 = vpop.f32.mrf.mxu0
    %v93 = vadd.f32 %v46, %v92
    %v94 = vpop.f32.mrf.mxu0
    %v95 = vadd.f32 %v46, %v94
    %96 = vmatmul.bf16.gmra.mxu0 %v71
    %v97 = vpop.f32.mrf.mxu0
    %v98 = vadd.f32 %v46, %v97
    %v99 = vpop.f32.mrf.mxu0
    %v100 = vadd.f32 %v46, %v99
    %101 = vdwg.mxu0
    %v102 = vmax.f32 %v83, 0.0
    %v103 = vmax.f32 %v85, 0.0
    %v104 = vmax.f32 %v88, 0.0
    %v105 = vmax.f32 %v90, 0.0
    %v106 = vmax.f32 %v93, 0.0
    %v107 = vmax.f32 %v95, 0.0
    %v108 = vmax.f32 %v98, 0.0
    %v109 = vmax.f32 %v100, 0.0
    %v110 = vpack.c.bf16 %v103, %v102
    %v111 = vpack.c.bf16 %v105, %v104
    %v112 = vpack.c.bf16 %v107, %v106
    %v113 = vpack.c.bf16 %v109, %v108
    %v114 = vld [vmem:[%s3] sm:$0xf]
    %v115 = vld [vmem:[%s3 + $0x4] sm:$0xf]
    %v116 = vld [vmem:[%s3 + $0x8] sm:$0xf]
    %v117 = vld [vmem:[%s3 + $0xc] sm:$0xf]
    %v118 = vld [vmem:[%s3 + $0x10] sm:$0xf]
    %v119 = vld [vmem:[%s3 + $0x14] sm:$0xf]
    %v120 = vld [vmem:[%s3 + $0x18] sm:$0xf]
    %v121 = vld [vmem:[%s3 + $0x1c] sm:$0xf]
    %v122 = vld [vmem:[%s3 + $0x20] sm:$0xf]
    %v123 = vld [vmem:[%s3 + $0x24] sm:$0xf]
    %v124 = vld [vmem:[%s3 + $0x28] sm:$0xf]
    %v125 = vld [vmem:[%s3 + $0x2c] sm:$0xf]
    %v126 = vld [vmem:[%s3 + $0x30] sm:$0xf]
    %v127 = vld [vmem:[%s3 + $0x34] sm:$0xf]
    %v128 = vld [vmem:[%s3 + $0x38] sm:$0xf]
    %v129 = vld [vmem:[%s3 + $0x3c] sm:$0xf]
    %v130 = vld [vmem:[%s4] sm:$0x1]
    %v132 = vperm.slane %v130, 0
    %v150 = vunpack.c.l.b16 %v114
    %v151 = vunpack.c.l.b16 %v115
    %v152 = vunpack.c.l.b16 %v116
    %v153 = vunpack.c.l.b16 %v117
    %v154 = vunpack.c.l.b16 %v118
    %v155 = vunpack.c.l.b16 %v119
    %v156 = vunpack.c.l.b16 %v120
    %v157 = vunpack.c.l.b16 %v121
    %v158 = vunpack.c.l.b16 %v122
    %v159 = vunpack.c.l.b16 %v123
    %v160 = vunpack.c.l.b16 %v124
    %v161 = vunpack.c.l.b16 %v125
    %v162 = vunpack.c.l.b16 %v126
    %v163 = vunpack.c.l.b16 %v127
    %v164 = vunpack.c.l.b16 %v128
    %v165 = vunpack.c.l.b16 %v129
    %v166 = vpack.c.b16 %v151, %v150
    %v167 = vpack.c.b16 %v153, %v152
    %v168 = vpack.c.b16 %v155, %v154
    %v169 = vpack.c.b16 %v157, %v156
    %v170 = vpack.c.b16 %v159, %v158
    %v171 = vpack.c.b16 %v161, %v160
    %v172 = vpack.c.b16 %v163, %v162
    %v173 = vpack.c.b16 %v165, %v164
    %182 = vmatpush.bf16.msra.mxu0 %v173
    %183 = vmatpush.bf16.msra.mxu0 %v172
    %184 = vmatpush.bf16.msra.mxu0 %v171
    %185 = vmatpush.bf16.msra.mxu0 %v170
    %186 = vmatpush.bf16.msra.mxu0 %v169
    %187 = vmatpush.bf16.msra.mxu0 %v168
    %188 = vmatpush.bf16.msra.mxu0 %v167
    %189 = vmatpush.bf16.msra.mxu0 %v166
    %190 = vmatmul.bf16.gmra.mxu0 %v110
    %v191 = vpop.f32.mrf.mxu0
    %v192 = vadd.f32 %v132, %v191
    %v193 = vpop.f32.mrf.mxu0
    %v194 = vadd.f32 %v132, %v193
    %195 = vmatmul.bf16.gmra.mxu0 %v111
    %v196 = vpop.f32.mrf.mxu0
    %v197 = vadd.f32 %v132, %v196
    %v198 = vpop.f32.mrf.mxu0
    %v199 = vadd.f32 %v132, %v198
    %200 = vmatmul.bf16.gmra.mxu0 %v112
    %v201 = vpop.f32.mrf.mxu0
    %v202 = vadd.f32 %v132, %v201
    %v203 = vpop.f32.mrf.mxu0
    %v204 = vadd.f32 %v132, %v203
    %205 = vmatmul.bf16.gmra.mxu0 %v113
    %v206 = vpop.f32.mrf.mxu0
    %v207 = vadd.f32 %v132, %v206
    %v208 = vpop.f32.mrf.mxu0
    %v209 = vadd.f32 %v132, %v208
    %210 = vdwg.mxu0
    %v211 = vmax.f32 %v192, 0.0
    %v212 = vmax.f32 %v194, 0.0
    %v213 = vmax.f32 %v197, 0.0
    %v214 = vmax.f32 %v199, 0.0
    %v215 = vmax.f32 %v202, 0.0
    %v216 = vmax.f32 %v204, 0.0
    %v217 = vmax.f32 %v207, 0.0
    %v218 = vmax.f32 %v209, 0.0
    %v219 = vpack.c.bf16 %v212, %v211
    %v220 = vpack.c.bf16 %v214, %v213
    %v221 = vpack.c.bf16 %v216, %v215
    %v222 = vpack.c.bf16 %v218, %v217
    %v223 = vld [vmem:[%s5] sm:$0xf]
    %v224 = vld [vmem:[%s5 + $0x4] sm:$0xf]
    %v225 = vld [vmem:[%s5 + $0x8] sm:$0xf]
    %v226 = vld [vmem:[%s5 + $0xc] sm:$0xf]
    %v227 = vld [vmem:[%s5 + $0x10] sm:$0xf]
    %v228 = vld [vmem:[%s5 + $0x14] sm:$0xf]
    %v229 = vld [vmem:[%s5 + $0x18] sm:$0xf]
    %v230 = vld [vmem:[%s5 + $0x1c] sm:$0xf]
    %v231 = vld [vmem:[%s6] sm:$0x1]
    %v233 = vperm.slane %v231, 0
    %v243 = vunpack.c.l.b16 %v223
    %v244 = vunpack.c.l.b16 %v224
    %v245 = vunpack.c.l.b16 %v225
    %v246 = vunpack.c.l.b16 %v226
    %v247 = vunpack.c.l.b16 %v227
    %v248 = vunpack.c.l.b16 %v228
    %v249 = vunpack.c.l.b16 %v229
    %v250 = vunpack.c.l.b16 %v230
    %v251 = vpack.c.b16 %v244, %v243
    %v252 = vpack.c.b16 %v246, %v245
    %v253 = vpack.c.b16 %v248, %v247
    %v254 = vpack.c.b16 %v250, %v249
    %vm259 = vcmask 523264
    %v261 = vsel %vm259, %v219, 0
    %v264 = vsel %vm259, %v220, 0
    %v267 = vsel %vm259, %v221, 0
    %v270 = vsel %vm259, %v222, 0
    %272 = vmatpush.bf16.msra.mxu0 0
    %273 = vmatpush.bf16.msra.mxu0 0
    %274 = vmatpush.bf16.msra.mxu0 0
    %275 = vmatpush.bf16.msra.mxu0 0
    %276 = vmatpush.bf16.msra.mxu0 %v254
    %277 = vmatpush.bf16.msra.mxu0 %v253
    %278 = vmatpush.bf16.msra.mxu0 %v252
    %279 = vmatpush.bf16.msra.mxu0 %v251
    %280 = vmatmul.bf16.gmra.mxu0 %v261
    %v281 = vpop.f32.mrf.mxu0
    %v282 = vadd.f32 %v233, %v281
    %v283 = vpop.f32.mrf.mxu0
    %v284 = vadd.f32 %v233, %v283
    %285 = vmatmul.bf16.gmra.mxu0 %v264
    %v286 = vpop.f32.mrf.mxu0
    %v287 = vadd.f32 %v233, %v286
    %v288 = vpop.f32.mrf.mxu0
    %v289 = vadd.f32 %v233, %v288
    %290 = vmatmul.bf16.gmra.mxu0 %v267
    %v291 = vpop.f32.mrf.mxu0
    %v292 = vadd.f32 %v233, %v291
    %v293 = vpop.f32.mrf.mxu0
    %v294 = vadd.f32 %v233, %v293
    %295 = vmatmul.bf16.gmra.mxu0 %v270
    %v296 = vpop.f32.mrf.mxu0
    %v297 = vadd.f32 %v233, %v296
    %v298 = vpop.f32.mrf.mxu0
    %v299 = vadd.f32 %v233, %v298
    %300 = vdwg.mxu0
    %v301 = vpack.c.bf16 %v282, %v282
    %v302 = vpack.c.bf16 %v284, %v284
    %v303 = vpack.c.bf16 %v287, %v287
    %v304 = vpack.c.bf16 %v289, %v289
    %v305 = vpack.c.bf16 %v292, %v292
    %v306 = vpack.c.bf16 %v294, %v294
    %v307 = vpack.c.bf16 %v297, %v297
    %v308 = vpack.c.bf16 %v299, %v299
    %309 = vst [vmem:[#allocation2] sm:$0xf] %v301
    %310 = vst [vmem:[#allocation2 + $0x4] sm:$0xf] %v302
    %311 = vst [vmem:[#allocation2 + $0x8] sm:$0xf] %v303
    %312 = vst [vmem:[#allocation2 + $0xc] sm:$0xf] %v304
    %313 = vst [vmem:[#allocation2 + $0x10] sm:$0xf] %v305
    %314 = vst [vmem:[#allocation2 + $0x14] sm:$0xf] %v306
    %315 = vst [vmem:[#allocation2 + $0x18] sm:$0xf] %v307
    %316 = vst [vmem:[#allocation2 + $0x1c] sm:$0xf] %v308
    // Predicated region
    $region30: #{tpu_custom_call.1} parent=1 // pred_check
      _
    $region31: #{tpu_custom_call.1} parent=1 // pred_check_branch
      %318 = sbr.rel (0) target = $region33
    $region32: #{tpu_custom_call.1} parent=1 // pred_region
      %320 = vsyncadd [#allocation3], 0
      %s321 = sshll.u32 [#allocation2], 4
      %s322 = int_to_ptr.vmem [resolvable:$true] %s321
      %s323 = sshll.u32 %s7, 4
      %s324 = int_to_ptr.hbm [resolvable:$true] %s323
      %329 = dma.vmem_to_hbm [thread:$0]  %s322, 512, %s324, [#allocation3], 64, 64, 4
    $region33: #{tpu_custom_call.1} parent=1 // pred_fallthru
      _
    // Predicated region
    $region34: #{tpu_custom_call.1} parent=1 // pred_check
      _
    $region35: #{tpu_custom_call.1} parent=1 // pred_check_branch
      %331 = sbr.rel (0) target = $region37
    $region36: #{tpu_custom_call.1} parent=1 // pred_region
      %333 = dma.done [#allocation3], 512
    $region37: #{tpu_custom_call.1} parent=1 // pred_fallthru
      _
    %334 = vsyncpa [#allocation3], 1

</llo_original>
